<compile_context>
chip_gen: v5e
topology: v5e:2x2
jax: 0.10.0
libtpu: 0.0.40
codegen_flags: <defaults>
</compile_context>

<pallas_src>
import jax
import jax.numpy as jnp
from jax import lax
from jax.experimental import pallas as pl
from jax.experimental.pallas import tpu as pltpu


def critic_kernel(s_ref, a_ref, w1s_ref, w1a_ref, b1_ref, w2_ref, b2_ref, o_ref):
    # In-kernel cast (no HBM traffic); a no-op when dtypes already match.
    s = s_ref[...].astype(w1s_ref.dtype)
    a = a_ref[...].astype(w1a_ref.dtype)

    # fc1 over the virtual concat, computed transposed so the batch is on lanes:
    #   h[H, tb] = W1s (H, ns) . s (tb, ns)^T + W1a (H, na) . a (tb, na)^T
    # "contract both minor dims" is the native MXU (q @ k^T) orientation.
    dn = (((1,), (1,)), ((), ()))
    h = lax.dot_general(w1s_ref[...], s, dn, preferred_element_type=jnp.float32)
    h = h + lax.dot_general(w1a_ref[...], a, dn, preferred_element_type=jnp.float32)

    # Bias + ReLU on fully dense (H, tb) vregs (VPU); b1 is an (H, 1) column.
    h = jnp.maximum(h + b1_ref[...], 0.0)

    # Output layer (N=1): keep it off the MXU — VPU multiply by the (H, 1) w2
    # column + sublane reduce -> lane-dense (1, tb) row.
    q = jnp.sum(h * w2_ref[...], axis=0, keepdims=True)
    q = q + b2_ref[0, 0]                              # scalar add from SMEM
    o_ref[...] = jnp.tanh(q).astype(o_ref.dtype)      # dense EUP + dense stores


def _pick_batch_tile(batch, block_b):
    """Batch tile: full extent for tiny batches; otherwise a multiple of 128,
    capped at block_b, and small enough that the grid has >= 2 steps (v7x)."""
    if batch <= 256:
        return batch
    block_b = max(128, (block_b // 128) * 128)
    half = -(-batch // 2)                              # cdiv(batch, 2)
    two_step = ((half + 127) // 128) * 128             # round up to 128
    return min(block_b, two_step)


def asv_critic_forward(s, a, params, *, block_b=4096):
    """s: [B, n_states], a: [B, n_actions]  ->  q: [B, 1] float32."""
    w1s, w1a, b1, w2, b2 = params
    B, n_states = s.shape
    n_actions = a.shape[1]
    H = w1s.shape[0]

    tb = _pick_batch_tile(B, block_b)
    num_tiles = pl.cdiv(B, tb)
    padded_b = num_tiles * tb

    resident = lambda i: (0, 0)     # weights/biases pinned across grid steps
    batched = lambda i: (i, 0)      # activation tiles stream along the batch
    out_map = lambda i: (0, i)      # lane-dense output row, one column block/step

    q_row = pl.pallas_call(
        critic_kernel,
        out_shape=jax.ShapeDtypeStruct((1, padded_b), jnp.float32),
        grid=(num_tiles,),
        in_specs=[
            pl.BlockSpec((tb, n_states), batched),
            pl.BlockSpec((tb, n_actions), batched),
            pl.BlockSpec((H, n_states), resident),
            pl.BlockSpec((H, n_actions), resident),
            pl.BlockSpec((H, 1), resident),
            pl.BlockSpec((H, 1), resident),
            pl.BlockSpec(memory_space=pltpu.SMEM),    # b2: (1, 1) scalar in SMEM
        ],
        out_specs=pl.BlockSpec((1, tb), out_map),
        compiler_params=pltpu.CompilerParams(
            dimension_semantics=("parallel",),        # 2-TC sharding on v7x
        ),
    )(s, a, w1s, w1a, b1, w2, b2)

    q = q_row.reshape(-1)
    if padded_b != B:
        q = q[:B]                   # drop rows computed from the clipped last tile
    return q.reshape(B, 1)


def init_params(key, n_states, n_actions, n_neurons=64):
    """Deterministic init mirroring the PyTorch module's __init__.

    Layouts are chosen for the kernel: fc1.weight is kept in torch's native
    (out_features, in_features) layout and pre-split at the state/action
    boundary; out.weight is stored as an (H, 1) column; b1 as an (H, 1) column.
    """
    k1, k2, k3, k4 = jax.random.split(key, 4)
    d_in = n_states + n_actions
    # fc1.weight ~ N(0, 0.1), shape (H, d_in); split so the kernel never needs
    # the concatenation of s and a.
    w1 = 0.1 * jax.random.normal(k1, (n_neurons, d_in), dtype=jnp.float32)
    w1s, w1a = w1[:, :n_states], w1[:, n_states:]
    # out.weight ~ N(0, 0.1), stored as a column for the sublane-reduce layer.
    w2 = 0.1 * jax.random.normal(k2, (n_neurons, 1), dtype=jnp.float32)
    # biases: PyTorch Linear default U(-1/sqrt(fan_in), 1/sqrt(fan_in)).
    bnd1 = 1.0 / (d_in ** 0.5)
    bnd2 = 1.0 / (n_neurons ** 0.5)
    b1 = jax.random.uniform(k3, (n_neurons, 1), minval=-bnd1, maxval=bnd1,
                            dtype=jnp.float32)
    b2 = jax.random.uniform(k4, (1, 1), minval=-bnd2, maxval=bnd2,
                            dtype=jnp.float32)
    return w1s, w1a, b1, w2, b2


if __name__ == "__main__":
    key = jax.random.PRNGKey(0)
    kp, kd = jax.random.split(key)

    n_states, n_actions, n_neurons = 16, 8, 64
    params = init_params(kp, n_states, n_actions, n_neurons)
    w1s, w1a, b1, w2, b2 = params

    def reference(s, a):
        # Pure-JAX reference of the PyTorch forward.
        x = jnp.concatenate([s, a], axis=-1)
        w1 = jnp.concatenate([w1s, w1a], axis=1)
        return jnp.tanh(jnp.maximum(x @ w1.T + b1.T, 0.0) @ w2 + b2)

    # batch=8 exercises the single full-extent tile; batch=600 exercises the
    # multi-step, lane-dense tiled path (2 tiles of 384 with a clipped tail).
    for batch in (8, 600):
        kd, ks, ka = jax.random.split(kd, 3)
        s = jax.random.normal(ks, (batch, n_states), dtype=jnp.float32)
        a = jax.random.normal(ka, (batch, n_actions), dtype=jnp.float32)

        q = asv_critic_forward(s, a, params)
        jax.block_until_ready(q)

        assert q.shape == (batch, 1)
        assert bool(jnp.all(jnp.abs(q) <= 1.0))
        ref = reference(s, a)
        assert bool(jnp.allclose(q, ref, atol=1e-5, rtol=1e-5)), \
            float(jnp.max(jnp.abs(q - ref)))

    print("KERNEL_OK")
</pallas_src>

<mosaic_0001>
module attributes {stable_mosaic.version = 11 : i64} {
  func.func @critic_kernel(%arg0: i32, %arg1: memref<8x16xf32, #tpu.memory_space<vmem>>, %arg2: memref<8x8xf32, #tpu.memory_space<vmem>>, %arg3: memref<64x16xf32, #tpu.memory_space<vmem>>, %arg4: memref<64x8xf32, #tpu.memory_space<vmem>>, %arg5: memref<64x1xf32, #tpu.memory_space<vmem>>, %arg6: memref<64x1xf32, #tpu.memory_space<vmem>>, %arg7: memref<1x1xf32, #tpu.memory_space<smem>>, %arg8: memref<1x8xf32, #tpu.memory_space<vmem>>) attributes {dimension_semantics = [#tpu.dimension_semantics<parallel>], iteration_bounds = array<i64: 1>, scalar_prefetch = 0 : i64, scratch_operands = 0 : i64, tpu.core_type = #tpu.core_type<tc>, window_params = [{transform_indices = @transform_0, window_bounds = array<i64: 8, 16>}, {transform_indices = @transform_1, window_bounds = array<i64: 8, 8>}, {pipeline_mode = #tpu.pipeline_mode<synchronous>, transform_indices = @transform_2, window_bounds = array<i64: 64, 16>}, {pipeline_mode = #tpu.pipeline_mode<synchronous>, transform_indices = @transform_3, window_bounds = array<i64: 64, 8>}, {pipeline_mode = #tpu.pipeline_mode<synchronous>, transform_indices = @transform_4, window_bounds = array<i64: 64, 1>}, {pipeline_mode = #tpu.pipeline_mode<synchronous>, transform_indices = @transform_5, window_bounds = array<i64: 64, 1>}, {transform_indices = @transform_6, window_bounds = array<i64: 1, 1>}, {transform_indices = @transform_7, window_bounds = array<i64: 1, 8>}]} {
    %c0 = arith.constant 0 : index
    %c0_0 = arith.constant 0 : index
    %0 = vector.load %arg1[%c0, %c0_0] : memref<8x16xf32, #tpu.memory_space<vmem>>, vector<8x16xf32>
    %c0_1 = arith.constant 0 : index
    %c0_2 = arith.constant 0 : index
    %1 = vector.load %arg2[%c0_1, %c0_2] : memref<8x8xf32, #tpu.memory_space<vmem>>, vector<8x8xf32>
    %c0_3 = arith.constant 0 : index
    %c0_4 = arith.constant 0 : index
    %2 = vector.load %arg3[%c0_3, %c0_4] : memref<64x16xf32, #tpu.memory_space<vmem>>, vector<64x16xf32>
    %cst = arith.constant dense<0.000000e+00> : vector<64x8xf32>
    %3 = tpu.matmul %2, %0, %cst {dimension_numbers = #tpu.dot_dimension_numbers<[1], [1], [0], [0], [0, 0, 1, 0], [], []>} : vector<64x16xf32>, vector<8x16xf32>, vector<64x8xf32> -> vector<64x8xf32>
    %c0_5 = arith.constant 0 : index
    %c0_6 = arith.constant 0 : index
    %4 = vector.load %arg4[%c0_5, %c0_6] : memref<64x8xf32, #tpu.memory_space<vmem>>, vector<64x8xf32>
    %cst_7 = arith.constant dense<0.000000e+00> : vector<64x8xf32>
    %5 = tpu.matmul %4, %1, %cst_7 {dimension_numbers = #tpu.dot_dimension_numbers<[1], [1], [0], [0], [0, 0, 1, 0], [], []>} : vector<64x8xf32>, vector<8x8xf32>, vector<64x8xf32> -> vector<64x8xf32>
    %6 = arith.addf %3, %5 : vector<64x8xf32>
    %c0_8 = arith.constant 0 : index
    %c0_9 = arith.constant 0 : index
    %7 = vector.load %arg5[%c0_8, %c0_9] : memref<64x1xf32, #tpu.memory_space<vmem>>, vector<64x1xf32>
    %8 = vector.broadcast %7 : vector<64x1xf32> to vector<64x8xf32>
    %9 = arith.addf %6, %8 : vector<64x8xf32>
    %cst_10 = arith.constant 0.000000e+00 : f32
    %10 = vector.broadcast %cst_10 : f32 to vector<64x8xf32>
    %11 = arith.maximumf %9, %10 : vector<64x8xf32>
    %c0_11 = arith.constant 0 : index
    %c0_12 = arith.constant 0 : index
    %12 = vector.load %arg6[%c0_11, %c0_12] : memref<64x1xf32, #tpu.memory_space<vmem>>, vector<64x1xf32>
    %13 = vector.broadcast %12 : vector<64x1xf32> to vector<64x8xf32>
    %14 = arith.mulf %11, %13 : vector<64x8xf32>
    %cst_13 = arith.constant dense<0.000000e+00> : vector<8xf32>
    %15 = vector.multi_reduction <add>, %14, %cst_13 [0] : vector<64x8xf32> to vector<8xf32>
    %16 = vector.shape_cast %15 : vector<8xf32> to vector<1x8xf32>
    %c0_14 = arith.constant 0 : index
    %c0_15 = arith.constant 0 : index
    %17 = memref.load %arg7[%c0_14, %c0_15] : memref<1x1xf32, #tpu.memory_space<smem>>
    %18 = vector.broadcast %17 : f32 to vector<1x8xf32>
    %19 = arith.addf %16, %18 : vector<1x8xf32>
    %20 = math.tanh %19 : vector<1x8xf32>
    %c0_16 = arith.constant 0 : index
    %c0_17 = arith.constant 0 : index
    %21 = vector.load %arg8[%c0_16, %c0_17] : memref<1x8xf32, #tpu.memory_space<vmem>>, vector<1x8xf32>
    tpu.vector_store %arg8[%c0_16, %c0_17], %20 {strides = array<i32>} : memref<1x8xf32, #tpu.memory_space<vmem>>, vector<1x8xf32>,
    return
  }
  func.func @transform_0(%arg0: i32) -> (i32, i32) {
    %c0_i32 = arith.constant 0 : i32
    %c0_i32_0 = arith.constant 0 : i32
    return %arg0, %c0_i32 : i32, i32
  }
  func.func @transform_1(%arg0: i32) -> (i32, i32) {
    %c0_i32 = arith.constant 0 : i32
    %c0_i32_0 = arith.constant 0 : i32
    return %arg0, %c0_i32 : i32, i32
  }
  func.func @transform_2(%arg0: i32) -> (i32, i32) {
    %c0_i32 = arith.constant 0 : i32
    %c0_i32_0 = arith.constant 0 : i32
    %c0_i32_1 = arith.constant 0 : i32
    return %c0_i32, %c0_i32_0 : i32, i32
  }
  func.func @transform_3(%arg0: i32) -> (i32, i32) {
    %c0_i32 = arith.constant 0 : i32
    %c0_i32_0 = arith.constant 0 : i32
    %c0_i32_1 = arith.constant 0 : i32
    return %c0_i32, %c0_i32_0 : i32, i32
  }
  func.func @transform_4(%arg0: i32) -> (i32, i32) {
    %c0_i32 = arith.constant 0 : i32
    %c0_i32_0 = arith.constant 0 : i32
    %c0_i32_1 = arith.constant 0 : i32
    return %c0_i32, %c0_i32_0 : i32, i32
  }
  func.func @transform_5(%arg0: i32) -> (i32, i32) {
    %c0_i32 = arith.constant 0 : i32
    %c0_i32_0 = arith.constant 0 : i32
    %c0_i32_1 = arith.constant 0 : i32
    return %c0_i32, %c0_i32_0 : i32, i32
  }
  func.func @transform_6(%arg0: i32) -> (i32, i32) {
    %c0_i32 = arith.constant 0 : i32
    %c0_i32_0 = arith.constant 0 : i32
    %c0_i32_1 = arith.constant 0 : i32
    return %c0_i32, %c0_i32_0 : i32, i32
  }
  func.func @transform_7(%arg0: i32) -> (i32, i32) {
    %c0_i32 = arith.constant 0 : i32
    %c0_i32_0 = arith.constant 0 : i32
    return %c0_i32, %arg0 : i32, i32
  }
}

</mosaic_0001>

<llo_original>
// kernel: tpu_custom_call.1
$region0: #{tpu_custom_call.1}
  #allocation0 [shape = 'u32[]', space=smem, size = 0x4, offset = 0x4, fixed_abs, tag = 'smem constant byte address 0x4 - core index']
  #allocation1 [shape = 'u32[72,128]{1,0:T(1,128)}', space=vmem, size = 0x9000, scoped, tag = 'internal scratch']
  #allocation2 [shape = 'f32[1,1]{1,0:T(1,128)S(6)}', space=smem, size = 0x200, scoped, tag = 'scoped memory for tpu_custom_call.1']
  %s0 = inlined_call_operand.vmem [shape: f32[8,16], index: 0, kind: input, shape index: {}]
  %s1 = inlined_call_operand.vmem [shape: f32[8,8], index: 1, kind: input, shape index: {}]
  %s2 = inlined_call_operand.vmem [shape: f32[64,16], index: 2, kind: input, shape index: {}]
  %s3 = inlined_call_operand.vmem [shape: f32[64,8], index: 3, kind: input, shape index: {}]
  %s4 = inlined_call_operand.vmem [shape: f32[64,1], index: 4, kind: input, shape index: {}]
  %s5 = inlined_call_operand.vmem [shape: f32[64,1], index: 5, kind: input, shape index: {}]
  %s6 = inlined_call_operand.<no memory space> [shape: f32[1,1], index: 6, kind: input, shape index: {}]
  %s7 = inlined_call_operand.hbm [shape: f32[1,8], index: 7, kind: output, shape index: {}]
  %s8 = sld [smem:[#allocation0]]
  $region38: #{tpu_custom_call.1} parent=0
    _
  %s10 = ssub.s32 1, %s8
  %s11 = scalar_select 0, %s10, %s8
  %12 = sst [smem:[#allocation2]] %s6
  $region1: #{tpu_custom_call.1} parent=0
    #allocation3 [shape = 'u8[512]{0}', space=vmem, size = 0x400, scoped, tag = 'output window, operand 0, single buffered']
    #allocation4 [shape = 's32[1]{0}', space=sflag, size = 0x4, scoped, tag = 'scoped memory for tpu_custom_call.1']
    %13 = vsyncpa [#allocation4], 0
    // Predicated region
    $region2: #{tpu_custom_call.1} parent=1 // pred_check
      _
    $region3: #{tpu_custom_call.1} parent=1 // pred_check_branch
      %15 = sbr.rel (0) target = $region5
    $region4: #{tpu_custom_call.1} parent=1 // pred_region
      _
    $region5: #{tpu_custom_call.1} parent=1 // pred_fallthru
      _
    // Predicated region
    $region6: #{tpu_custom_call.1} parent=1 // pred_check
      _
    $region7: #{tpu_custom_call.1} parent=1 // pred_check_branch
      %17 = sbr.rel (0) target = $region9
    $region8: #{tpu_custom_call.1} parent=1 // pred_region
      _
    $region9: #{tpu_custom_call.1} parent=1 // pred_fallthru
      _
    // Predicated region
    $region10: #{tpu_custom_call.1} parent=1 // pred_check
      _
    $region11: #{tpu_custom_call.1} parent=1 // pred_check_branch
      %19 = sbr.rel (0) target = $region13
    $region12: #{tpu_custom_call.1} parent=1 // pred_region
      _
    $region13: #{tpu_custom_call.1} parent=1 // pred_fallthru
      _
    // Predicated region
    $region14: #{tpu_custom_call.1} parent=1 // pred_check
      _
    $region15: #{tpu_custom_call.1} parent=1 // pred_check_branch
      %21 = sbr.rel (0) target = $region17
    $region16: #{tpu_custom_call.1} parent=1 // pred_region
      _
    $region17: #{tpu_custom_call.1} parent=1 // pred_fallthru
      _
    // Predicated region
    $region18: #{tpu_custom_call.1} parent=1 // pred_check
      _
    $region19: #{tpu_custom_call.1} parent=1 // pred_check_branch
      %23 = sbr.rel (0) target = $region21
    $region20: #{tpu_custom_call.1} parent=1 // pred_region
      _
    $region21: #{tpu_custom_call.1} parent=1 // pred_fallthru
      _
    // Predicated region
    $region22: #{tpu_custom_call.1} parent=1 // pred_check
      _
    $region23: #{tpu_custom_call.1} parent=1 // pred_check_branch
      %25 = sbr.rel (0) target = $region25
    $region24: #{tpu_custom_call.1} parent=1 // pred_region
      _
    $region25: #{tpu_custom_call.1} parent=1 // pred_fallthru
      _
    // Predicated region
    $region26: #{tpu_custom_call.1} parent=1 // pred_check
      _
    $region27: #{tpu_custom_call.1} parent=1 // pred_check_branch
      %27 = sbr.rel (0) target = $region29
    $region28: #{tpu_custom_call.1} parent=1 // pred_region
      _
    $region29: #{tpu_custom_call.1} parent=1 // pred_fallthru
      _
    %v28 = vld [vmem:[%s0] sm:$0xff]
    %v29 = vld [vmem:[%s1] sm:$0xff]
    %v30 = vld [vmem:[%s2] sm:$0xff]
    %v31 = vld [vmem:[%s2 + $0x8] sm:$0xff]
    %v32 = vld [vmem:[%s2 + $0x10] sm:$0xff]
    %v33 = vld [vmem:[%s2 + $0x18] sm:$0xff]
    %v34 = vld [vmem:[%s2 + $0x20] sm:$0xff]
    %v35 = vld [vmem:[%s2 + $0x28] sm:$0xff]
    %v36 = vld [vmem:[%s2 + $0x30] sm:$0xff]
    %v37 = vld [vmem:[%s2 + $0x38] sm:$0xff]
    %v38 = vld [vmem:[%s3] sm:$0xff]
    %v39 = vld [vmem:[%s3 + $0x8] sm:$0xff]
    %v40 = vld [vmem:[%s3 + $0x10] sm:$0xff]
    %v41 = vld [vmem:[%s3 + $0x18] sm:$0xff]
    %v42 = vld [vmem:[%s3 + $0x20] sm:$0xff]
    %v43 = vld [vmem:[%s3 + $0x28] sm:$0xff]
    %v44 = vld [vmem:[%s3 + $0x30] sm:$0xff]
    %v45 = vld [vmem:[%s3 + $0x38] sm:$0xff]
    %vm46 = vcmask 64512
    %v48 = vsel %vm46, %v38, 0
    %v51 = vsel %vm46, %v39, 0
    %v54 = vsel %vm46, %v40, 0
    %v57 = vsel %vm46, %v41, 0
    %v60 = vsel %vm46, %v42, 0
    %v63 = vsel %vm46, %v43, 0
    %v66 = vsel %vm46, %v44, 0
    %v69 = vsel %vm46, %v45, 0
    %v72 = vsel %vm46, %v29, 0
    %74 = vmatpush.xpose.msra.mxu0 0.0
    %75 = vmatpush.xpose.msra.mxu0 0.0
    %76 = vmatpush.xpose.msra.mxu0 0.0
    %77 = vmatpush.xpose.msra.mxu0 0.0
    %78 = vmatpush.xpose.msra.mxu0 0.0
    %79 = vmatpush.xpose.msra.mxu0 0.0
    %80 = vmatpush.xpose.msra.mxu0 0.0
    %81 = vmatpush.xpose.msra.mxu0 0.0
    %82 = vmatpush.xpose.msra.mxu0 0.0
    %83 = vmatpush.xpose.msra.mxu0 0.0
    %84 = vmatpush.xpose.msra.mxu0 0.0
    %85 = vmatpush.xpose.msra.mxu0 0.0
    %86 = vmatpush.xpose.msra.mxu0 0.0
    %87 = vmatpush.xpose.msra.mxu0 0.0
    %88 = vmatpush.xpose.msra.mxu0 0.0
    %89 = vmatpush.xpose.msra.mxu0 %v72
    %90 = vmatmul.f32.gmra.mxu0 %v48
    %v91 = vpop.f32.mrf.mxu0
    %v92 = vadd.f32 0.0, %v91
    %93 = vmatmul.f32.gmra.mxu0 %v51
    %v94 = vpop.f32.mrf.mxu0
    %v95 = vadd.f32 0.0, %v94
    %96 = vmatmul.f32.gmra.mxu0 %v54
    %v97 = vpop.f32.mrf.mxu0
    %v98 = vadd.f32 0.0, %v97
    %99 = vmatmul.f32.gmra.mxu0 %v57
    %v100 = vpop.f32.mrf.mxu0
    %v101 = vadd.f32 0.0, %v100
    %102 = vmatmul.f32.gmra.mxu0 %v60
    %v103 = vpop.f32.mrf.mxu0
    %v104 = vadd.f32 0.0, %v103
    %105 = vmatmul.f32.gmra.mxu0 %v63
    %v106 = vpop.f32.mrf.mxu0
    %v107 = vadd.f32 0.0, %v106
    %108 = vmatmul.f32.gmra.mxu0 %v66
    %v109 = vpop.f32.mrf.mxu0
    %v110 = vadd.f32 0.0, %v109
    %111 = vmatmul.f32.gmra.mxu0 %v69
    %v112 = vpop.f32.mrf.mxu0
    %v113 = vadd.f32 0.0, %v112
    %114 = vdwg.mxu0
    %vm115 = vcmask 130048
    %v117 = vsel %vm115, %v30, 0
    %v120 = vsel %vm115, %v31, 0
    %v123 = vsel %vm115, %v32, 0
    %v126 = vsel %vm115, %v33, 0
    %v129 = vsel %vm115, %v34, 0
    %v132 = vsel %vm115, %v35, 0
    %v135 = vsel %vm115, %v36, 0
    %v138 = vsel %vm115, %v37, 0
    %v141 = vsel %vm115, %v28, 0
    %143 = vmatpush.xpose.msra.mxu0 0.0
    %144 = vmatpush.xpose.msra.mxu0 0.0
    %145 = vmatpush.xpose.msra.mxu0 0.0
    %146 = vmatpush.xpose.msra.mxu0 0.0
    %147 = vmatpush.xpose.msra.mxu0 0.0
    %148 = vmatpush.xpose.msra.mxu0 0.0
    %149 = vmatpush.xpose.msra.mxu0 0.0
    %150 = vmatpush.xpose.msra.mxu0 0.0
    %151 = vmatpush.xpose.msra.mxu0 0.0
    %152 = vmatpush.xpose.msra.mxu0 0.0
    %153 = vmatpush.xpose.msra.mxu0 0.0
    %154 = vmatpush.xpose.msra.mxu0 0.0
    %155 = vmatpush.xpose.msra.mxu0 0.0
    %156 = vmatpush.xpose.msra.mxu0 0.0
    %157 = vmatpush.xpose.msra.mxu0 0.0
    %158 = vmatpush.xpose.msra.mxu0 %v141
    %159 = vmatmul.f32.gmra.mxu0 %v117
    %v160 = vpop.f32.mrf.mxu0
    %v161 = vadd.f32 %v92, %v160
    %162 = vmatmul.f32.gmra.mxu0 %v120
    %v163 = vpop.f32.mrf.mxu0
    %v164 = vadd.f32 %v95, %v163
    %165 = vmatmul.f32.gmra.mxu0 %v123
    %v166 = vpop.f32.mrf.mxu0
    %v167 = vadd.f32 %v98, %v166
    %168 = vmatmul.f32.gmra.mxu0 %v126
    %v169 = vpop.f32.mrf.mxu0
    %v170 = vadd.f32 %v101, %v169
    %171 = vmatmul.f32.gmra.mxu0 %v129
    %v172 = vpop.f32.mrf.mxu0
    %v173 = vadd.f32 %v104, %v172
    %174 = vmatmul.f32.gmra.mxu0 %v132
    %v175 = vpop.f32.mrf.mxu0
    %v176 = vadd.f32 %v107, %v175
    %177 = vmatmul.f32.gmra.mxu0 %v135
    %v178 = vpop.f32.mrf.mxu0
    %v179 = vadd.f32 %v110, %v178
    %180 = vmatmul.f32.gmra.mxu0 %v138
    %v181 = vpop.f32.mrf.mxu0
    %v182 = vadd.f32 %v113, %v181
    %183 = vdwg.mxu0
    %v184 = vld [vmem:[%s4] sm:$0xff]
    %v185 = vld [vmem:[%s4 + $0x8] sm:$0xff]
    %v186 = vld [vmem:[%s4 + $0x10] sm:$0xff]
    %v187 = vld [vmem:[%s4 + $0x18] sm:$0xff]
    %v188 = vld [vmem:[%s4 + $0x20] sm:$0xff]
    %v189 = vld [vmem:[%s4 + $0x28] sm:$0xff]
    %v190 = vld [vmem:[%s4 + $0x30] sm:$0xff]
    %v191 = vld [vmem:[%s4 + $0x38] sm:$0xff]
    %193 = vset.pattern.permute.xlu0 0
    %194 = vperm.xlu0 %193, %v184
    %v195 = vpop.permute.xlu0 %194
    %198 = vset.pattern.permute.xlu0 0
    %199 = vperm.xlu0 %198, %v185
    %v200 = vpop.permute.xlu0 %199
    %203 = vset.pattern.permute.xlu0 0
    %204 = vperm.xlu0 %203, %v186
    %v205 = vpop.permute.xlu0 %204
    %208 = vset.pattern.permute.xlu0 0
    %209 = vperm.xlu0 %208, %v187
    %v210 = vpop.permute.xlu0 %209
    %213 = vset.pattern.permute.xlu0 0
    %214 = vperm.xlu0 %213, %v188
    %v215 = vpop.permute.xlu0 %214
    %218 = vset.pattern.permute.xlu0 0
    %219 = vperm.xlu0 %218, %v189
    %v220 = vpop.permute.xlu0 %219
    %223 = vset.pattern.permute.xlu0 0
    %224 = vperm.xlu0 %223, %v190
    %v225 = vpop.permute.xlu0 %224
    %228 = vset.pattern.permute.xlu0 0
    %229 = vperm.xlu0 %228, %v191
    %v230 = vpop.permute.xlu0 %229
    %v232 = vadd.f32 %v161, %v195
    %v233 = vadd.f32 %v164, %v200
    %v234 = vadd.f32 %v167, %v205
    %v235 = vadd.f32 %v170, %v210
    %v236 = vadd.f32 %v173, %v215
    %v237 = vadd.f32 %v176, %v220
    %v238 = vadd.f32 %v179, %v225
    %v239 = vadd.f32 %v182, %v230
    %v240 = vmax.f32 %v232, 0.0
    %v241 = vmax.f32 %v233, 0.0
    %v242 = vmax.f32 %v234, 0.0
    %v243 = vmax.f32 %v235, 0.0
    %v244 = vmax.f32 %v236, 0.0
    %v245 = vmax.f32 %v237, 0.0
    %v246 = vmax.f32 %v238, 0.0
    %v247 = vmax.f32 %v239, 0.0
    %v248 = vld [vmem:[%s5] sm:$0xff]
    %v249 = vld [vmem:[%s5 + $0x8] sm:$0xff]
    %v250 = vld [vmem:[%s5 + $0x10] sm:$0xff]
    %v251 = vld [vmem:[%s5 + $0x18] sm:$0xff]
    %v252 = vld [vmem:[%s5 + $0x20] sm:$0xff]
    %v253 = vld [vmem:[%s5 + $0x28] sm:$0xff]
    %v254 = vld [vmem:[%s5 + $0x30] sm:$0xff]
    %v255 = vld [vmem:[%s5 + $0x38] sm:$0xff]
    %257 = vset.pattern.permute.xlu0 0
    %258 = vperm.xlu0 %257, %v248
    %v259 = vpop.permute.xlu0 %258
    %262 = vset.pattern.permute.xlu0 0
    %263 = vperm.xlu0 %262, %v249
    %v264 = vpop.permute.xlu0 %263
    %267 = vset.pattern.permute.xlu0 0
    %268 = vperm.xlu0 %267, %v250
    %v269 = vpop.permute.xlu0 %268
    %272 = vset.pattern.permute.xlu0 0
    %273 = vperm.xlu0 %272, %v251
    %v274 = vpop.permute.xlu0 %273
    %277 = vset.pattern.permute.xlu0 0
    %278 = vperm.xlu0 %277, %v252
    %v279 = vpop.permute.xlu0 %278
    %282 = vset.pattern.permute.xlu0 0
    %283 = vperm.xlu0 %282, %v253
    %v284 = vpop.permute.xlu0 %283
    %287 = vset.pattern.permute.xlu0 0
    %288 = vperm.xlu0 %287, %v254
    %v289 = vpop.permute.xlu0 %288
    %292 = vset.pattern.permute.xlu0 0
    %293 = vperm.xlu0 %292, %v255
    %v294 = vpop.permute.xlu0 %293
    %v296 = vmul.f32 %v240, %v259
    %v297 = vmul.f32 %v241, %v264
    %v298 = vmul.f32 %v242, %v269
    %v299 = vmul.f32 %v243, %v274
    %v300 = vmul.f32 %v244, %v279
    %v301 = vmul.f32 %v245, %v284
    %v302 = vmul.f32 %v246, %v289
    %v303 = vmul.f32 %v247, %v294
    %v304 = vsel %vm46, %v296, 0.0
    %v305 = vsel %vm46, %v297, 0.0
    %v306 = vadd.f32 %v304, %v305
    %v307 = vsel %vm46, %v298, 0.0
    %v308 = vadd.f32 %v306, %v307
    %v309 = vsel %vm46, %v299, 0.0
    %v310 = vadd.f32 %v308, %v309
    %v311 = vsel %vm46, %v300, 0.0
    %v312 = vadd.f32 %v310, %v311
    %v313 = vsel %vm46, %v301, 0.0
    %v314 = vadd.f32 %v312, %v313
    %v315 = vsel %vm46, %v302, 0.0
    %v316 = vadd.f32 %v314, %v315
    %v317 = vsel %vm46, %v303, 0.0
    %v318 = vadd.f32 %v316, %v317
    %v319 = vrot.slane %v318, 4
    %v320 = vadd.f32 %v318, %v319
    %v321 = vrot.slane %v320, 2
    %v322 = vadd.f32 %v320, %v321
    %v323 = vrot.slane %v322, 1
    %v324 = vadd.f32 %v322, %v323
    %s325 = sld [smem:[#allocation2]]
    %v326 = vstv %s325
    %v327 = vadd.f32 %v324, %v326
    %v328 = vtanh.pop %v327
    %vm329 = vcmask 57344
    %330 = vst.msk [vmem:[#allocation3] sm:$0x1] %vm329, %v328
    // Predicated region
    $region30: #{tpu_custom_call.1} parent=1 // pred_check
      _
    $region31: #{tpu_custom_call.1} parent=1 // pred_check_branch
      %332 = sbr.rel (0) target = $region33
    $region32: #{tpu_custom_call.1} parent=1 // pred_region
      %334 = vsyncadd [#allocation4], 0
      %s336 = sshll.u32 [#allocation3], 4
      %s337 = int_to_ptr.vmem [resolvable:$true] %s336
      %s338 = sshll.u32 %s7, 4
      %s339 = int_to_ptr.hbm [resolvable:$true] %s338
      %341 = dma.vmem_to_hbm [thread:$0]  %s337, 16, %s339, [#allocation4]
    $region33: #{tpu_custom_call.1} parent=1 // pred_fallthru
      _
    // Predicated region
    $region34: #{tpu_custom_call.1} parent=1 // pred_check
      _
    $region35: #{tpu_custom_call.1} parent=1 // pred_check_branch
      %343 = sbr.rel (0) target = $region37
    $region36: #{tpu_custom_call.1} parent=1 // pred_region
      %345 = dma.done [#allocation4], 16
    $region37: #{tpu_custom_call.1} parent=1 // pred_fallthru
      _
    %346 = vsyncpa [#allocation4], 1

</llo_original>
